<compile_context>
chip_gen: v7x
topology: tpu7x:2x2x1
jax: 0.10.0
libtpu: 0.0.40
codegen_flags: <defaults>
</compile_context>

<pallas_src>
import functools

import jax
import jax.numpy as jnp
import numpy as np
from jax.experimental import pallas as pl
from jax.experimental.pallas import tpu as pltpu


def einfft_kernel(x_ref, w_ref, f2d_ref, gtop_ref, gbot_ref, o_ref,
                  *, n, compute_dtype):
    cd = compute_dtype

    # ---- forward 2-D DFT: one MXU matmul -> [Xr | Xi] lane-concatenated ----
    x = x_ref[...]                                                # (rows, N), cd
    y = jnp.dot(x, f2d_ref[...],
                preferred_element_type=jnp.float32)               # (rows, 2N) f32
    xr = y[:, :n]                                                 # aligned lane slices
    xi = y[:, n:]

    # ---- per-row (= per-channel) weights, broadcast along lanes ----
    wv = w_ref[...]                                               # (rows, 3) f32
    cwr = wv[:, 0:1]                                              # Re(sum_f complex_weight)
    cwi = wv[:, 1:2]                                              # Im(sum_f complex_weight)
    rws = wv[:, 2:3]                                              # sum_f real_weight

    # ---- elementwise epilogue, fully lane-dense f32 on VPU/EUP ----
    t = xr + xi                                                   # Re+Im of fft2(x)
    pr = t * cwr                                                  # real(einsum_mul)
    pi = t * cwi                                                  # imag(einsum_mul)
    ar = pr * jax.nn.sigmoid(pr)                                  # SiLU
    ai = pi * jax.nn.sigmoid(pi)
    er = ar * rws + ai * cwr                                      # real(emmed)
    ei = ai * cwi                                                 # imag(emmed)

    # ---- inverse 2-D DFT, real part; 2x and 1/(H*W) folded into Gt/Gb ----
    out = (jnp.dot(er.astype(cd), gtop_ref[...], preferred_element_type=jnp.float32)
           + jnp.dot(ei.astype(cd), gbot_ref[...], preferred_element_type=jnp.float32))
    o_ref[...] = out.astype(o_ref.dtype)


def _default_vmem_limit():
    """Chip-aware scoped-VMEM limit: conservative on v7x, roomy on v5e/v6e."""
    try:
        phys = int(pltpu.get_tpu_info().vmem_capacity_bytes)
    except Exception:
        return 32 * 1024 * 1024
    if phys <= 64 * 1024 * 1024:                 # v7x-class: 64 MiB physical
        return 32 * 1024 * 1024
    return min(96 * 1024 * 1024, int(phys * 3 // 4))   # v5e/v6e: 128 MiB physical


def _pick_rows_block(R, N, *, const_bytes, vmem_limit):
    """Largest sublane-aligned divisor of R whose live footprint fits VMEM."""
    budget = max(vmem_limit - 2 * const_bytes, 4 * 1024 * 1024)
    # ~64*N bytes of live f32 state per row (double-buffered I/O + in-kernel temps)
    cap = max(8, (budget // (64 * N)) // 8 * 8)
    if R <= cap:
        # Split once when possible so both v7x TensorCores get a parallel step
        # (one extra ~0.35us step is negligible on single-TC v5e/v6e).
        if R >= 16 and R % 16 == 0:
            return R // 2
        return R
    cands = [d for d in range(8, R, 8) if R % d == 0 and d <= cap]
    return max(cands) if cands else R


def einfft_forward(x, complex_weight, real_weight, *,
                   rows_block=None, compute_dtype=jnp.float32):
    B, C, H, W = x.shape
    N = H * W
    R = B * C

    # Flatten batch*channel into MXU rows, spatial into lanes.
    x_flat = x.reshape(R, N).astype(compute_dtype)

    # einsum('bchw,cf->bchw', ., W) sums f out -> per-channel scalar sum_f W[c, f];
    # expand to per-row so the BlockSpec can slice it directly.
    cw_sum = jnp.sum(complex_weight, axis=1)                      # (C,) complex64
    rw_sum = jnp.sum(real_weight, axis=1).astype(jnp.float32)     # (C,)
    w_all = jnp.stack([jnp.real(cw_sum), jnp.imag(cw_sum), rw_sum],
                      axis=1).astype(jnp.float32)                 # (C, 3)
    w_rows = jnp.tile(w_all, (B, 1))                              # (R, 3), row r -> channel r % C

    # Fused 2-D DFT matrices: ang[n, m] with n = i*W + j, m = p*W + q.
    hh = jnp.arange(H, dtype=jnp.float32)
    ww = jnp.arange(W, dtype=jnp.float32)
    ip = jnp.outer(hh, hh) / H                                    # i*p/H
    jq = jnp.outer(ww, ww) / W                                    # j*q/W
    ang = 2.0 * jnp.pi * (ip[:, None, :, None] + jq[None, :, None, :])
    ang = ang.reshape(N, N)                                       # symmetric
    cosm = jnp.cos(ang)
    sinm = jnp.sin(ang)
    s = 2.0 / N                                                   # ifft2 norm * (emmed+emmed)
    f2d = jnp.concatenate([cosm, -sinm], axis=1).astype(compute_dtype)   # (N, 2N)
    g_top = (s * cosm).astype(compute_dtype)                             # (N, N)
    g_bot = (-s * sinm).astype(compute_dtype)                            # (N, N)

    itemsize = jnp.dtype(compute_dtype).itemsize
    const_bytes = 4 * N * N * itemsize
    vmem_limit = _default_vmem_limit()
    # TODO(synk): add a staged per-axis DFT fallback for large H*W where the
    # fused (HW, 2HW)/(HW, HW) matrices no longer fit VMEM.
    assert 2 * const_bytes + 2 * 1024 * 1024 <= vmem_limit, (
        "fused 2-D DFT matrices do not fit VMEM; staged fallback not implemented")

    if rows_block is None:
        rows_block = _pick_rows_block(R, N, const_bytes=const_bytes,
                                      vmem_limit=vmem_limit)
    assert R % rows_block == 0
    grid = (R // rows_block,)

    kernel = functools.partial(einfft_kernel, n=N, compute_dtype=compute_dtype)

    grid_spec = pltpu.PrefetchScalarGridSpec(
        num_scalar_prefetch=0,
        grid=grid,
        in_specs=[
            pl.BlockSpec((rows_block, N), lambda r: (r, 0)),       # x rows
            pl.BlockSpec((rows_block, 3), lambda r: (r, 0)),       # per-row weights
            pl.BlockSpec((N, 2 * N), lambda r: (0, 0)),            # F2D (constant)
            pl.BlockSpec((N, N), lambda r: (0, 0)),                # Gt  (constant)
            pl.BlockSpec((N, N), lambda r: (0, 0)),                # Gb  (constant)
        ],
        out_specs=pl.BlockSpec((rows_block, N), lambda r: (r, 0)),
    )

    const_elems = f2d.size + g_top.size + g_bot.size + w_rows.size
    cost = pl.CostEstimate(
        flops=int(8 * R * N * N + 10 * R * N),
        transcendentals=int(2 * R * N),
        bytes_accessed=int(itemsize * (R * N) + 4 * (R * N) + itemsize * const_elems),
    )

    out_flat = pl.pallas_call(
        kernel,
        out_shape=jax.ShapeDtypeStruct((R, N), jnp.float32),
        grid_spec=grid_spec,
        compiler_params=pltpu.CompilerParams(
            dimension_semantics=("parallel",),
            vmem_limit_bytes=vmem_limit),
        cost_estimate=cost,
    )(x_flat, w_rows, f2d, g_top, g_bot)

    # Lane-dense (R, HW) rows in-kernel; reshape back to NCHW outside (free).
    return out_flat.reshape(B, C, H, W)


if __name__ == "__main__":
    key = jax.random.PRNGKey(0)
    B, C, F, H, W = 2, 4, 8, 16, 16     # batch, in_channels, out_channels, h, w
    k1, k2, k3, k4 = jax.random.split(key, 4)
    x = jax.random.normal(k1, (B, C, H, W), dtype=jnp.float32)
    complex_weight = (jax.random.normal(k2, (C, F), dtype=jnp.float32)
                      + 1j * jax.random.normal(k3, (C, F), dtype=jnp.float32)
                      ).astype(jnp.complex64)
    real_weight = jax.random.normal(k4, (C, F), dtype=jnp.float32)

    out = jax.block_until_ready(einfft_forward(x, complex_weight, real_weight))

    # Pure-JAX reference mirroring the PyTorch forward exactly.
    X = jnp.fft.fft2(x, axes=(-2, -1))
    cws = jnp.sum(complex_weight, axis=1)[None, :, None, None]
    rws = jnp.sum(real_weight, axis=1)[None, :, None, None]
    mul = (X.real + X.imag) * cws
    emmed = jax.nn.silu(jnp.real(mul)) * rws + jax.nn.silu(jnp.imag(mul)) * cws
    ref = jnp.fft.ifft2(emmed + emmed, axes=(-2, -1)).real

    assert out.shape == ref.shape and out.dtype == jnp.float32
    np.testing.assert_allclose(np.asarray(out), np.asarray(ref),
                               rtol=5e-3, atol=5e-2)
    print("KERNEL_OK")
</pallas_src>

<mosaic_0001>
module attributes {stable_mosaic.version = 11 : i64} {
  func.func @einfft_kernel(%arg0: i32, %arg1: memref<8x256xf32, #tpu.memory_space<vmem>>, %arg2: memref<8x3xf32, #tpu.memory_space<vmem>>, %arg3: memref<256x512xf32, #tpu.memory_space<vmem>>, %arg4: memref<256x256xf32, #tpu.memory_space<vmem>>, %arg5: memref<256x256xf32, #tpu.memory_space<vmem>>, %arg6: memref<8x256xf32, #tpu.memory_space<vmem>>) attributes {dimension_semantics = [#tpu.dimension_semantics<parallel>], iteration_bounds = array<i64: 1>, scalar_prefetch = 0 : i64, scratch_operands = 0 : i64, tpu.core_type = #tpu.core_type<tc>, window_params = [{transform_indices = @transform_0, window_bounds = array<i64: 8, 256>}, {transform_indices = @transform_1, window_bounds = array<i64: 8, 3>}, {pipeline_mode = #tpu.pipeline_mode<synchronous>, transform_indices = @transform_2, window_bounds = array<i64: 256, 512>}, {pipeline_mode = #tpu.pipeline_mode<synchronous>, transform_indices = @transform_3, window_bounds = array<i64: 256, 256>}, {pipeline_mode = #tpu.pipeline_mode<synchronous>, transform_indices = @transform_4, window_bounds = array<i64: 256, 256>}, {transform_indices = @transform_5, window_bounds = array<i64: 8, 256>}]} {
    %c0 = arith.constant 0 : index
    %c0_0 = arith.constant 0 : index
    %0 = vector.load %arg1[%c0, %c0_0] : memref<8x256xf32, #tpu.memory_space<vmem>>, vector<8x256xf32>
    %c0_1 = arith.constant 0 : index
    %c0_2 = arith.constant 0 : index
    %1 = vector.load %arg3[%c0_1, %c0_2] : memref<256x512xf32, #tpu.memory_space<vmem>>, vector<256x512xf32>
    %cst = arith.constant dense<0.000000e+00> : vector<8x512xf32>
    %2 = tpu.matmul %0, %1, %cst {dimension_numbers = #tpu.dot_dimension_numbers<[1], [0], [0], [1], [0, 0, 1, 1], [], []>} : vector<8x256xf32>, vector<256x512xf32>, vector<8x512xf32> -> vector<8x512xf32>
    %3 = vector.extract_strided_slice %2 {offsets = [0, 0], sizes = [8, 256], strides = [1, 1]} : vector<8x512xf32> to vector<8x256xf32>
    %4 = vector.extract_strided_slice %2 {offsets = [0, 256], sizes = [8, 256], strides = [1, 1]} : vector<8x512xf32> to vector<8x256xf32>
    %c0_3 = arith.constant 0 : index
    %c0_4 = arith.constant 0 : index
    %5 = vector.load %arg2[%c0_3, %c0_4] : memref<8x3xf32, #tpu.memory_space<vmem>>, vector<8x3xf32>
    %6 = vector.extract_strided_slice %5 {offsets = [0, 0], sizes = [8, 1], strides = [1, 1]} : vector<8x3xf32> to vector<8x1xf32>
    %7 = vector.extract_strided_slice %5 {offsets = [0, 1], sizes = [8, 1], strides = [1, 1]} : vector<8x3xf32> to vector<8x1xf32>
    %8 = vector.extract_strided_slice %5 {offsets = [0, 2], sizes = [8, 1], strides = [1, 1]} : vector<8x3xf32> to vector<8x1xf32>
    %9 = arith.addf %3, %4 : vector<8x256xf32>
    %10 = vector.broadcast %6 : vector<8x1xf32> to vector<8x256xf32>
    %11 = arith.mulf %9, %10 : vector<8x256xf32>
    %12 = vector.broadcast %7 : vector<8x1xf32> to vector<8x256xf32>
    %13 = arith.mulf %9, %12 : vector<8x256xf32>
    %14 = arith.negf %11 : vector<8x256xf32>
    %15 = math.exp %14 : vector<8x256xf32>
    %cst_5 = arith.constant 1.000000e+00 : f32
    %16 = vector.broadcast %cst_5 : f32 to vector<8x256xf32>
    %17 = arith.addf %16, %15 : vector<8x256xf32>
    %18 = arith.divf %16, %17 : vector<8x256xf32>
    %19 = arith.mulf %11, %18 : vector<8x256xf32>
    %20 = arith.negf %13 : vector<8x256xf32>
    %21 = math.exp %20 : vector<8x256xf32>
    %cst_6 = arith.constant 1.000000e+00 : f32
    %22 = vector.broadcast %cst_6 : f32 to vector<8x256xf32>
    %23 = arith.addf %22, %21 : vector<8x256xf32>
    %24 = arith.divf %22, %23 : vector<8x256xf32>
    %25 = arith.mulf %13, %24 : vector<8x256xf32>
    %26 = vector.broadcast %8 : vector<8x1xf32> to vector<8x256xf32>
    %27 = arith.mulf %19, %26 : vector<8x256xf32>
    %28 = vector.broadcast %6 : vector<8x1xf32> to vector<8x256xf32>
    %29 = arith.mulf %25, %28 : vector<8x256xf32>
    %30 = arith.addf %27, %29 : vector<8x256xf32>
    %31 = vector.broadcast %7 : vector<8x1xf32> to vector<8x256xf32>
    %32 = arith.mulf %25, %31 : vector<8x256xf32>
    %c0_7 = arith.constant 0 : index
    %c0_8 = arith.constant 0 : index
    %33 = vector.load %arg4[%c0_7, %c0_8] : memref<256x256xf32, #tpu.memory_space<vmem>>, vector<256x256xf32>
    %cst_9 = arith.constant dense<0.000000e+00> : vector<8x256xf32>
    %34 = tpu.matmul %30, %33, %cst_9 {dimension_numbers = #tpu.dot_dimension_numbers<[1], [0], [0], [1], [0, 0, 1, 1], [], []>} : vector<8x256xf32>, vector<256x256xf32>, vector<8x256xf32> -> vector<8x256xf32>
    %c0_10 = arith.constant 0 : index
    %c0_11 = arith.constant 0 : index
    %35 = vector.load %arg5[%c0_10, %c0_11] : memref<256x256xf32, #tpu.memory_space<vmem>>, vector<256x256xf32>
    %cst_12 = arith.constant dense<0.000000e+00> : vector<8x256xf32>
    %36 = tpu.matmul %32, %35, %cst_12 {dimension_numbers = #tpu.dot_dimension_numbers<[1], [0], [0], [1], [0, 0, 1, 1], [], []>} : vector<8x256xf32>, vector<256x256xf32>, vector<8x256xf32> -> vector<8x256xf32>
    %37 = arith.addf %34, %36 : vector<8x256xf32>
    %c0_13 = arith.constant 0 : index
    %c0_14 = arith.constant 0 : index
    %38 = vector.load %arg6[%c0_13, %c0_14] : memref<8x256xf32, #tpu.memory_space<vmem>>, vector<8x256xf32>
    tpu.vector_store %arg6[%c0_13, %c0_14], %37 {strides = array<i32>} : memref<8x256xf32, #tpu.memory_space<vmem>>, vector<8x256xf32>,
    return
  }
  func.func @transform_0(%arg0: i32) -> (i32, i32) {
    %c0_i32 = arith.constant 0 : i32
    %c0_i32_0 = arith.constant 0 : i32
    return %arg0, %c0_i32 : i32, i32
  }
  func.func @transform_1(%arg0: i32) -> (i32, i32) {
    %c0_i32 = arith.constant 0 : i32
    %c0_i32_0 = arith.constant 0 : i32
    return %arg0, %c0_i32 : i32, i32
  }
  func.func @transform_2(%arg0: i32) -> (i32, i32) {
    %c0_i32 = arith.constant 0 : i32
    %c0_i32_0 = arith.constant 0 : i32
    %c0_i32_1 = arith.constant 0 : i32
    return %c0_i32, %c0_i32_0 : i32, i32
  }
  func.func @transform_3(%arg0: i32) -> (i32, i32) {
    %c0_i32 = arith.constant 0 : i32
    %c0_i32_0 = arith.constant 0 : i32
    %c0_i32_1 = arith.constant 0 : i32
    return %c0_i32, %c0_i32_0 : i32, i32
  }
  func.func @transform_4(%arg0: i32) -> (i32, i32) {
    %c0_i32 = arith.constant 0 : i32
    %c0_i32_0 = arith.constant 0 : i32
    %c0_i32_1 = arith.constant 0 : i32
    return %c0_i32, %c0_i32_0 : i32, i32
  }
  func.func @transform_5(%arg0: i32) -> (i32, i32) {
    %c0_i32 = arith.constant 0 : i32
    %c0_i32_0 = arith.constant 0 : i32
    return %arg0, %c0_i32 : i32, i32
  }
}

</mosaic_0001>

<llo_original>
// kernel: tpu_custom_call.1
$region0: #{tpu_custom_call.1}
  #allocation0 [shape = 'u32[]', space=smem, size = 0x4, offset = 0x4, fixed_abs, tag = 'smem constant byte address 0x4 - core index']
  #allocation1 [shape = 'u32[144,128]{1,0:T(1,128)}', space=vmem, size = 0x12000, scoped, tag = 'internal scratch']
  %s0 = inlined_call_operand.hbm [shape: f32[8,256], index: 0, kind: input, shape index: {}]
  %s1 = inlined_call_operand.vmem [shape: f32[8,3], index: 1, kind: input, shape index: {}]
  %s2 = inlined_call_operand.hbm [shape: f32[256,512], index: 2, kind: input, shape index: {}]
  %s3 = inlined_call_operand.hbm [shape: f32[256,256], index: 3, kind: input, shape index: {}]
  %s4 = inlined_call_operand.hbm [shape: f32[256,256], index: 4, kind: input, shape index: {}]
  %s5 = inlined_call_operand.hbm [shape: f32[8,256], index: 5, kind: output, shape index: {}]
  %s6 = sld [smem:[#allocation0]]
  $region46: #{tpu_custom_call.1} parent=0
    _
  %s8 = ssub.s32 1, %s6
  %s9 = scalar_select 0, %s8, %s6
  $region1: #{tpu_custom_call.1} parent=0
    #allocation2 [shape = 'u8[8192]{0}', space=vmem, size = 0x2000, scoped, tag = 'input window, operand 0, single buffered']
    #allocation3 [shape = 's32[1]{0}', space=sflag, size = 0x4, scoped, tag = 'scoped memory for tpu_custom_call.1']
    #allocation4 [shape = 's32[1]{0}', space=sflag, size = 0x4, scoped, tag = 'scoped memory for tpu_custom_call.1']
    #allocation5 [shape = 'u8[524288]{0}', space=vmem, size = 0x80000, scoped, tag = 'input window, operand 2, single buffered']
    #allocation6 [shape = 's32[1]{0}', space=sflag, size = 0x4, scoped, tag = 'scoped memory for tpu_custom_call.1']
    #allocation7 [shape = 'u8[262144]{0}', space=vmem, size = 0x40000, scoped, tag = 'input window, operand 3, single buffered']
    #allocation8 [shape = 'u8[262144]{0}', space=vmem, size = 0x40000, scoped, tag = 'input window, operand 4, single buffered']
    #allocation9 [shape = 's32[1]{0}', space=sflag, size = 0x4, scoped, tag = 'scoped memory for tpu_custom_call.1']
    #allocation10 [shape = 'u8[8192]{0}', space=vmem, size = 0x2000, scoped, tag = 'output window, operand 0, single buffered']
    %10 = vsyncpa [#allocation3], 0
    %11 = vsyncpa [#allocation6], 0
    %12 = vsyncpa [#allocation9], 0
    %13 = vsyncpa [#allocation4], 0
    // Predicated region
    $region2: #{tpu_custom_call.1} parent=1 // pred_check
      _
    $region3: #{tpu_custom_call.1} parent=1 // pred_check_branch
      %15 = sbr.rel (0) target = $region5
    $region4: #{tpu_custom_call.1} parent=1 // pred_region
      %s17 = ssub.s32 256, 256
      %18 = vsyncadd [#allocation3], %s17
      %s20 = sshll.u32 [#allocation2], 4
      %s21 = int_to_ptr.vmem [resolvable:$true] %s20
      %23 = dma.hbm_to_vmem [thread:$0]  %s0, 256, %s21, [#allocation3]
    $region5: #{tpu_custom_call.1} parent=1 // pred_fallthru
      _
    // Predicated region
    $region6: #{tpu_custom_call.1} parent=1 // pred_check
      _
    $region7: #{tpu_custom_call.1} parent=1 // pred_check_branch
      %25 = sbr.rel (0) target = $region9
    $region8: #{tpu_custom_call.1} parent=1 // pred_region
      _
    $region9: #{tpu_custom_call.1} parent=1 // pred_fallthru
      _
    // Predicated region
    $region10: #{tpu_custom_call.1} parent=1 // pred_check
      _
    $region11: #{tpu_custom_call.1} parent=1 // pred_check_branch
      %27 = sbr.rel (0) target = $region13
    $region12: #{tpu_custom_call.1} parent=1 // pred_region
      %s29 = ssub.s32 16384, 16384
      %30 = vsyncadd [#allocation6], %s29
      %s31 = sshll.u32 [#allocation5], 4
      %s32 = int_to_ptr.vmem [resolvable:$true] %s31
      %37 = dma.hbm_to_vmem [thread:$0]  %s2, 16384, %s32, [#allocation6], 512, 512, 32
    $region13: #{tpu_custom_call.1} parent=1 // pred_fallthru
      _
    // Predicated region
    $region14: #{tpu_custom_call.1} parent=1 // pred_check
      _
    $region15: #{tpu_custom_call.1} parent=1 // pred_check_branch
      %39 = sbr.rel (0) target = $region17
    $region16: #{tpu_custom_call.1} parent=1 // pred_region
      %s41 = ssub.s32 8192, 8192
      %42 = vsyncadd [#allocation6], %s41
      %s43 = sshll.u32 [#allocation7], 4
      %s44 = int_to_ptr.vmem [resolvable:$true] %s43
      %49 = dma.hbm_to_vmem [thread:$0]  %s3, 8192, %s44, [#allocation6], 256, 256, 16
    $region17: #{tpu_custom_call.1} parent=1 // pred_fallthru
      _
    // Predicated region
    $region18: #{tpu_custom_call.1} parent=1 // pred_check
      _
    $region19: #{tpu_custom_call.1} parent=1 // pred_check_branch
      %51 = sbr.rel (0) target = $region21
    $region20: #{tpu_custom_call.1} parent=1 // pred_region
      %s53 = ssub.s32 8192, 8192
      %54 = vsyncadd [#allocation9], %s53
      %s55 = sshll.u32 [#allocation8], 4
      %s56 = int_to_ptr.vmem [resolvable:$true] %s55
      %61 = dma.hbm_to_vmem [thread:$0]  %s4, 8192, %s56, [#allocation9], 256, 256, 16
    $region21: #{tpu_custom_call.1} parent=1 // pred_fallthru
      _
    // Predicated region
    $region22: #{tpu_custom_call.1} parent=1 // pred_check
      _
    $region23: #{tpu_custom_call.1} parent=1 // pred_check_branch
      %63 = sbr.rel (0) target = $region25
    $region24: #{tpu_custom_call.1} parent=1 // pred_region
      %64 = dma.done [#allocation3], 256
    $region25: #{tpu_custom_call.1} parent=1 // pred_fallthru
      _
    // Predicated region
    $region26: #{tpu_custom_call.1} parent=1 // pred_check
      _
    $region27: #{tpu_custom_call.1} parent=1 // pred_check_branch
      %66 = sbr.rel (0) target = $region29
    $region28: #{tpu_custom_call.1} parent=1 // pred_region
      %67 = dma.done [#allocation6], 16384
    $region29: #{tpu_custom_call.1} parent=1 // pred_fallthru
      _
    // Predicated region
    $region30: #{tpu_custom_call.1} parent=1 // pred_check
      _
    $region31: #{tpu_custom_call.1} parent=1 // pred_check_branch
      %69 = sbr.rel (0) target = $region33
    $region32: #{tpu_custom_call.1} parent=1 // pred_region
      %70 = dma.done [#allocation6], 8192
    $region33: #{tpu_custom_call.1} parent=1 // pred_fallthru
      _
    // Predicated region
    $region34: #{tpu_custom_call.1} parent=1 // pred_check
      _
    $region35: #{tpu_custom_call.1} parent=1 // pred_check_branch
      %72 = sbr.rel (0) target = $region37
    $region36: #{tpu_custom_call.1} parent=1 // pred_region
      %73 = dma.done [#allocation9], 8192
    $region37: #{tpu_custom_call.1} parent=1 // pred_fallthru
      _
    %v74 = vld [vmem:[#allocation2] sm:$0xff]
    %v75 = vld [vmem:[#allocation2 + $0x8] sm:$0xff]
    %v76 = vld [vmem:[#allocation5] sm:$0xff]
    %v77 = vld [vmem:[#allocation5 + $0x8] sm:$0xff]
    %v78 = vld [vmem:[#allocation5 + $0x10] sm:$0xff]
    %v79 = vld [vmem:[#allocation5 + $0x18] sm:$0xff]
    %v80 = vld [vmem:[#allocation5 + $0x20] sm:$0xff]
    %v81 = vld [vmem:[#allocation5 + $0x28] sm:$0xff]
    %v82 = vld [vmem:[#allocation5 + $0x30] sm:$0xff]
    %v83 = vld [vmem:[#allocation5 + $0x38] sm:$0xff]
    %v84 = vld [vmem:[#allocation5 + $0x40] sm:$0xff]
    %v85 = vld [vmem:[#allocation5 + $0x48] sm:$0xff]
    %v86 = vld [vmem:[#allocation5 + $0x50] sm:$0xff]
    %v87 = vld [vmem:[#allocation5 + $0x58] sm:$0xff]
    %v88 = vld [vmem:[#allocation5 + $0x60] sm:$0xff]
    %v89 = vld [vmem:[#allocation5 + $0x68] sm:$0xff]
    %v90 = vld [vmem:[#allocation5 + $0x70] sm:$0xff]
    %v91 = vld [vmem:[#allocation5 + $0x78] sm:$0xff]
    %v92 = vld [vmem:[#allocation5 + $0x80] sm:$0xff]
    %v93 = vld [vmem:[#allocation5 + $0x88] sm:$0xff]
    %v94 = vld [vmem:[#allocation5 + $0x90] sm:$0xff]
    %v95 = vld [vmem:[#allocation5 + $0x98] sm:$0xff]
    %v96 = vld [vmem:[#allocation5 + $0xa0] sm:$0xff]
    %v97 = vld [vmem:[#allocation5 + $0xa8] sm:$0xff]
    %v98 = vld [vmem:[#allocation5 + $0xb0] sm:$0xff]
    %v99 = vld [vmem:[#allocation5 + $0xb8] sm:$0xff]
    %v100 = vld [vmem:[#allocation5 + $0xc0] sm:$0xff]
    %v101 = vld [vmem:[#allocation5 + $0xc8] sm:$0xff]
    %v102 = vld [vmem:[#allocation5 + $0xd0] sm:$0xff]
    %v103 = vld [vmem:[#allocation5 + $0xd8] sm:$0xff]
    %v104 = vld [vmem:[#allocation5 + $0xe0] sm:$0xff]
    %v105 = vld [vmem:[#allocation5 + $0xe8] sm:$0xff]
    %v106 = vld [vmem:[#allocation5 + $0xf0] sm:$0xff]
    %v107 = vld [vmem:[#allocation5 + $0xf8] sm:$0xff]
    %v108 = vld [vmem:[#allocation5 + $0x100] sm:$0xff]
    %v109 = vld [vmem:[#allocation5 + $0x108] sm:$0xff]
    %v110 = vld [vmem:[#allocation5 + $0x110] sm:$0xff]
    %v111 = vld [vmem:[#allocation5 + $0x118] sm:$0xff]
    %v112 = vld [vmem:[#allocation5 + $0x120] sm:$0xff]
    %v113 = vld [vmem:[#allocation5 + $0x128] sm:$0xff]
    %v114 = vld [vmem:[#allocation5 + $0x130] sm:$0xff]
    %v115 = vld [vmem:[#allocation5 + $0x138] sm:$0xff]
    %v116 = vld [vmem:[#allocation5 + $0x140] sm:$0xff]
    %v117 = vld [vmem:[#allocation5 + $0x148] sm:$0xff]
    %v118 = vld [vmem:[#allocation5 + $0x150] sm:$0xff]
    %v119 = vld [vmem:[#allocation5 + $0x158] sm:$0xff]
    %v120 = vld [vmem:[#allocation5 + $0x160] sm:$0xff]
    %v121 = vld [vmem:[#allocation5 + $0x168] sm:$0xff]
    %v122 = vld [vmem:[#allocation5 + $0x170] sm:$0xff]
    %v123 = vld [vmem:[#allocation5 + $0x178] sm:$0xff]
    %v124 = vld [vmem:[#allocation5 + $0x180] sm:$0xff]
    %v125 = vld [vmem:[#allocation5 + $0x188] sm:$0xff]
    %v126 = vld [vmem:[#allocation5 + $0x190] sm:$0xff]
    %v127 = vld [vmem:[#allocation5 + $0x198] sm:$0xff]
    %v128 = vld [vmem:[#allocation5 + $0x1a0] sm:$0xff]
    %v129 = vld [vmem:[#allocation5 + $0x1a8] sm:$0xff]
    %v130 = vld [vmem:[#allocation5 + $0x1b0] sm:$0xff]
    %v131 = vld [vmem:[#allocation5 + $0x1b8] sm:$0xff]
    %v132 = vld [vmem:[#allocation5 + $0x1c0] sm:$0xff]
    %v133 = vld [vmem:[#allocation5 + $0x1c8] sm:$0xff]
    %v134 = vld [vmem:[#allocation5 + $0x1d0] sm:$0xff]
    %v135 = vld [vmem:[#allocation5 + $0x1d8] sm:$0xff]
    %v136 = vld [vmem:[#allocation5 + $0x1e0] sm:$0xff]
    %v137 = vld [vmem:[#allocation5 + $0x1e8] sm:$0xff]
    %v138 = vld [vmem:[#allocation5 + $0x1f0] sm:$0xff]
    %v139 = vld [vmem:[#allocation5 + $0x1f8] sm:$0xff]
    %v140 = vld [vmem:[#allocation5 + $0x200] sm:$0xff]
    %v141 = vld [vmem:[#allocation5 + $0x208] sm:$0xff]
    %v142 = vld [vmem:[#allocation5 + $0x210] sm:$0xff]
    %v143 = vld [vmem:[#allocation5 + $0x218] sm:$0xff]
    %v144 = vld [vmem:[#allocation5 + $0x220] sm:$0xff]
    %v145 = vld [vmem:[#allocation5 + $0x228] sm:$0xff]
    %v146 = vld [vmem:[#allocation5 + $0x230] sm:$0xff]
    %v147 = vld [vmem:[#allocation5 + $0x238] sm:$0xff]
    %v148 = vld [vmem:[#allocation5 + $0x240] sm:$0xff]
    %v149 = vld [vmem:[#allocation5 + $0x248] sm:$0xff]
    %v150 = vld [vmem:[#allocation5 + $0x250] sm:$0xff]
    %v151 = vld [vmem:[#allocation5 + $0x258] sm:$0xff]
    %v152 = vld [vmem:[#allocation5 + $0x260] sm:$0xff]
    %v153 = vld [vmem:[#allocation5 + $0x268] sm:$0xff]
    %v154 = vld [vmem:[#allocation5 + $0x270] sm:$0xff]
    %v155 = vld [vmem:[#allocation5 + $0x278] sm:$0xff]
    %v156 = vld [vmem:[#allocation5 + $0x280] sm:$0xff]
    %v157 = vld [vmem:[#allocation5 + $0x288] sm:$0xff]
    %v158 = vld [vmem:[#allocation5 + $0x290] sm:$0xff]
    %v159 = vld [vmem:[#allocation5 + $0x298] sm:$0xff]
    %v160 = vld [vmem:[#allocation5 + $0x2a0] sm:$0xff]
    %v161 = vld [vmem:[#allocation5 + $0x2a8] sm:$0xff]
    %v162 = vld [vmem:[#allocation5 + $0x2b0] sm:$0xff]
    %v163 = vld [vmem:[#allocation5 + $0x2b8] sm:$0xff]
    %v164 = vld [vmem:[#allocation5 + $0x2c0] sm:$0xff]
    %v165 = vld [vmem:[#allocation5 + $0x2c8] sm:$0xff]
    %v166 = vld [vmem:[#allocation5 + $0x2d0] sm:$0xff]
    %v167 = vld [vmem:[#allocation5 + $0x2d8] sm:$0xff]
    %v168 = vld [vmem:[#allocation5 + $0x2e0] sm:$0xff]
    %v169 = vld [vmem:[#allocation5 + $0x2e8] sm:$0xff]
    %v170 = vld [vmem:[#allocation5 + $0x2f0] sm:$0xff]
    %v171 = vld [vmem:[#allocation5 + $0x2f8] sm:$0xff]
    %v172 = vld [vmem:[#allocation5 + $0x300] sm:$0xff]
    %v173 = vld [vmem:[#allocation5 + $0x308] sm:$0xff]
    %v174 = vld [vmem:[#allocation5 + $0x310] sm:$0xff]
    %v175 = vld [vmem:[#allocation5 + $0x318] sm:$0xff]
    %v176 = vld [vmem:[#allocation5 + $0x320] sm:$0xff]
    %v177 = vld [vmem:[#allocation5 + $0x328] sm:$0xff]
    %v178 = vld [vmem:[#allocation5 + $0x330] sm:$0xff]
    %v179 = vld [vmem:[#allocation5 + $0x338] sm:$0xff]
    %v180 = vld [vmem:[#allocation5 + $0x340] sm:$0xff]
    %v181 = vld [vmem:[#allocation5 + $0x348] sm:$0xff]
    %v182 = vld [vmem:[#allocation5 + $0x350] sm:$0xff]
    %v183 = vld [vmem:[#allocation5 + $0x358] sm:$0xff]
    %v184 = vld [vmem:[#allocation5 + $0x360] sm:$0xff]
    %v185 = vld [vmem:[#allocation5 + $0x368] sm:$0xff]
    %v186 = vld [vmem:[#allocation5 + $0x370] sm:$0xff]
    %v187 = vld [vmem:[#allocation5 + $0x378] sm:$0xff]
    %v188 = vld [vmem:[#allocation5 + $0x380] sm:$0xff]
    %v189 = vld [vmem:[#allocation5 + $0x388] sm:$0xff]
    %v190 = vld [vmem:[#allocation5 + $0x390] sm:$0xff]
    %v191 = vld [vmem:[#allocation5 + $0x398] sm:$0xff]
    %v192 = vld [vmem:[#allocation5 + $0x3a0] sm:$0xff]
    %v193 = vld [vmem:[#allocation5 + $0x3a8] sm:$0xff]
    %v194 = vld [vmem:[#allocation5 + $0x3b0] sm:$0xff]
    %v195 = vld [vmem:[#allocation5 + $0x3b8] sm:$0xff]
    %v196 = vld [vmem:[#allocation5 + $0x3c0] sm:$0xff]
    %v197 = vld [vmem:[#allocation5 + $0x3c8] sm:$0xff]
    %v198 = vld [vmem:[#allocation5 + $0x3d0] sm:$0xff]
    %v199 = vld [vmem:[#allocation5 + $0x3d8] sm:$0xff]
    %v200 = vld [vmem:[#allocation5 + $0x3e0] sm:$0xff]
    %v201 = vld [vmem:[#allocation5 + $0x3e8] sm:$0xff]
    %v202 = vld [vmem:[#allocation5 + $0x3f0] sm:$0xff]
    %v203 = vld [vmem:[#allocation5 + $0x3f8] sm:$0xff]
    %204 = vmatprep.subr.mxu0 %v77
    %205 = vmatpush1.msra.mxu0 %v76
    %206 = vmatprep.subr.mxu0 %v81
    %207 = vmatpush1.msra.mxu0 %v80
    %208 = vmatprep.subr.mxu0 %v85
    %209 = vmatpush1.msra.mxu0 %v84
    %210 = vmatprep.subr.mxu0 %v89
    %211 = vmatpush1.msra.mxu0 %v88
    %212 = vmatprep.subr.mxu0 %v93
    %213 = vmatpush1.msra.mxu0 %v92
    %214 = vmatprep.subr.mxu0 %v97
    %215 = vmatpush1.msra.mxu0 %v96
    %216 = vmatprep.subr.mxu0 %v101
    %217 = vmatpush1.msra.mxu0 %v100
    %218 = vmatprep.subr.mxu0 %v105
    %219 = vmatpush1.msra.mxu0 %v104
    %220 = vmatprep.subr.mxu0 %v109
    %221 = vmatpush1.msra.mxu0 %v108
    %222 = vmatprep.subr.mxu0 %v113
    %223 = vmatpush1.msra.mxu0 %v112
    %224 = vmatprep.subr.mxu0 %v117
    %225 = vmatpush1.msra.mxu0 %v116
    %226 = vmatprep.subr.mxu0 %v121
    %227 = vmatpush1.msra.mxu0 %v120
    %228 = vmatprep.subr.mxu0 %v125
    %229 = vmatpush1.msra.mxu0 %v124
    %230 = vmatprep.subr.mxu0 %v129
    %231 = vmatpush1.msra.mxu0 %v128
    %232 = vmatprep.subr.mxu0 %v133
    %233 = vmatpush1.msra.mxu0 %v132
    %234 = vmatprep.subr.mxu0 %v137
    %235 = vmatpush1.msra.mxu0 %v136
    %236 = vmatprep.subr.mxu0 %v141
    %237 = vmatpush1.msra.mxu0 %v140
    %238 = vmatprep.subr.mxu0 %v145
    %239 = vmatpush1.msra.mxu0 %v144
    %240 = vmatprep.subr.mxu0 %v149
    %241 = vmatpush1.msra.mxu0 %v148
    %242 = vmatprep.subr.mxu0 %v153
    %243 = vmatpush1.msra.mxu0 %v152
    %244 = vmatprep.subr.mxu0 %v157
    %245 = vmatpush1.msra.mxu0 %v156
    %246 = vmatprep.subr.mxu0 %v161
    %247 = vmatpush1.msra.mxu0 %v160
    %248 = vmatprep.subr.mxu0 %v165
    %249 = vmatpush1.msra.mxu0 %v164
    %250 = vmatprep.subr.mxu0 %v169
    %251 = vmatpush1.msra.mxu0 %v168
    %252 = vmatprep.subr.mxu0 %v173
    %253 = vmatpush1.msra.mxu0 %v172
    %254 = vmatprep.subr.mxu0 %v177
    %255 = vmatpush1.msra.mxu0 %v176
    %256 = vmatprep.subr.mxu0 %v181
    %257 = vmatpush1.msra.mxu0 %v180
    %258 = vmatprep.subr.mxu0 %v185
    %259 = vmatpush1.msra.mxu0 %v184
    %260 = vmatprep.subr.mxu0 %v189
    %261 = vmatpush1.msra.mxu0 %v188
    %262 = vmatprep.subr.mxu0 %v193
    %263 = vmatpush1.msra.mxu0 %v192
    %264 = vmatprep.subr.mxu0 %v197
    %265 = vmatpush1.msra.mxu0 %v196
    %266 = vmatprep.subr.mxu0 %v201
    %267 = vmatpush1.msra.mxu0 %v200
    %268 = vmatprep.mubr.f32.mxu0 %v75
    %269 = vmatmul.mubr.f32.gmra.mrb[0].mxu0 %v74
    %v270 = vpop.f32.mrb[0].mxu0
    %v271 = vadd.f32 0.0, %v270
    %v272 = vpop.f32.mrb[0].mxu0
    %v273 = vadd.f32 0.0, %v272
    %274 = vdwg.mxu0
    %275 = vmatprep.subr.mxu0 %v79
    %276 = vmatpush1.msra.mxu0 %v78
    %277 = vmatprep.subr.mxu0 %v83
    %278 = vmatpush1.msra.mxu0 %v82
    %279 = vmatprep.subr.mxu0 %v87
    %280 = vmatpush1.msra.mxu0 %v86
    %281 = vmatprep.subr.mxu0 %v91
    %282 = vmatpush1.msra.mxu0 %v90
    %283 = vmatprep.subr.mxu0 %v95
    %284 = vmatpush1.msra.mxu0 %v94
    %285 = vmatprep.subr.mxu0 %v99
    %286 = vmatpush1.msra.mxu0 %v98
    %287 = vmatprep.subr.mxu0 %v103
    %288 = vmatpush1.msra.mxu0 %v102
    %289 = vmatprep.subr.mxu0 %v107
    %290 = vmatpush1.msra.mxu0 %v106
    %291 = vmatprep.subr.mxu0 %v111
    %292 = vmatpush1.msra.mxu0 %v110
    %293 = vmatprep.subr.mxu0 %v115
    %294 = vmatpush1.msra.mxu0 %v114
    %295 = vmatprep.subr.mxu0 %v119
    %296 = vmatpush1.msra.mxu0 %v118
    %297 = vmatprep.subr.mxu0 %v123
    %298 = vmatpush1.msra.mxu0 %v122
    %299 = vmatprep.subr.mxu0 %v127
    %300 = vmatpush1.msra.mxu0 %v126
    %301 = vmatprep.subr.mxu0 %v131
    %302 = vmatpush1.msra.mxu0 %v130
    %303 = vmatprep.subr.mxu0 %v135
    %304 = vmatpush1.msra.mxu0 %v134
    %305 = vmatprep.subr.mxu0 %v139
    %306 = vmatpush1.msra.mxu0 %v138
    %307 = vmatprep.subr.mxu0 %v143
    %308 = vmatpush1.msra.mxu0 %v142
    %309 = vmatprep.subr.mxu0 %v147
    %310 = vmatpush1.msra.mxu0 %v146
    %311 = vmatprep.subr.mxu0 %v151
    %312 = vmatpush1.msra.mxu0 %v150
    %313 = vmatprep.subr.mxu0 %v155
    %314 = vmatpush1.msra.mxu0 %v154
    %315 = vmatprep.subr.mxu0 %v159
    %316 = vmatpush1.msra.mxu0 %v158
    %317 = vmatprep.subr.mxu0 %v163
    %318 = vmatpush1.msra.mxu0 %v162
    %319 = vmatprep.subr.mxu0 %v167
    %320 = vmatpush1.msra.mxu0 %v166
    %321 = vmatprep.subr.mxu0 %v171
    %322 = vmatpush1.msra.mxu0 %v170
    %323 = vmatprep.subr.mxu0 %v175
    %324 = vmatpush1.msra.mxu0 %v174
    %325 = vmatprep.subr.mxu0 %v179
    %326 = vmatpush1.msra.mxu0 %v178
    %327 = vmatprep.subr.mxu0 %v183
    %328 = vmatpush1.msra.mxu0 %v182
    %329 = vmatprep.subr.mxu0 %v187
    %330 = vmatpush1.msra.mxu0 %v186
    %331 = vmatprep.subr.mxu0 %v191
    %332 = vmatpush1.msra.mxu0 %v190
    %333 = vmatprep.subr.mxu0 %v195
    %334 = vmatpush1.msra.mxu0 %v194
    %335 = vmatprep.subr.mxu0 %v199
    %336 = vmatpush1.msra.mxu0 %v198
    %337 = vmatprep.subr.mxu0 %v203
    %338 = vmatpush1.msra.mxu0 %v202
    %339 = vmatprep.mubr.f32.mxu0 %v75
    %340 = vmatmul.mubr.f32.gmra.mrb[0].mxu0 %v74
    %v341 = vpop.f32.mrb[0].mxu0
    %v342 = vadd.f32 0.0, %v341
    %v343 = vpop.f32.mrb[0].mxu0
    %v344 = vadd.f32 0.0, %v343
    %345 = vdwg.mxu0
    %v346 = vld [vmem:[%s1] sm:$0xff]
    %v347 = vadd.f32 %v271, %v342
    %v348 = vadd.f32 %v273, %v344
    %350 = vset.pattern.permute.xlu0 0
    %351 = vperm.xlu0 %350, %v346
    %v352 = vpop.permute.xlu0 %351
    %v354 = vmul.f32 %v347, %v352
    %v355 = vmul.f32 %v348, %v352
    %356 = vset.pattern.permute.xlu0 1
    %357 = vperm.xlu0 %356, %v346
    %v358 = vpop.permute.xlu0 %357
    %v360 = vmul.f32 %v347, %v358
    %v361 = vmul.f32 %v348, %v358
    %v362 = vxor.u32 %v354, 2147483648
    %v363 = vxor.u32 %v355, 2147483648
    %v364 = vmul.f32 %v362, 1.442695
    %v365 = vpow.pop %v364
    %v366 = vmul.f32 %v363, 1.442695
    %v367 = vpow.pop %v366
    %v368 = vadd.f32 %v365, 1.0
    %v369 = vadd.f32 %v367, 1.0
    %v370 = vrcp.pop %v368
    %v371 = vmul.f32 1.0, %v370
    %v372 = vrcp.pop %v369
    %v373 = vmul.f32 1.0, %v372
    %v374 = vmul.f32 %v354, %v371
    %v375 = vmul.f32 %v355, %v373
    %v376 = vxor.u32 %v360, 2147483648
    %v377 = vxor.u32 %v361, 2147483648
    %v378 = vmul.f32 %v376, 1.442695
    %v379 = vpow.pop %v378
    %v380 = vmul.f32 %v377, 1.442695
    %v381 = vpow.pop %v380
    %v382 = vadd.f32 %v379, 1.0
    %v383 = vadd.f32 %v381, 1.0
    %v384 = vrcp.pop %v382
    %v385 = vmul.f32 1.0, %v384
    %v386 = vrcp.pop %v383
    %v387 = vmul.f32 1.0, %v386
    %v388 = vmul.f32 %v360, %v385
    %v389 = vmul.f32 %v361, %v387
    %390 = vset.pattern.permute.xlu0 2
    %391 = vperm.xlu0 %390, %v346
    %v392 = vpop.permute.xlu0 %391
    %v394 = vmul.f32 %v374, %v392
    %v395 = vmul.f32 %v375, %v392
    %v396 = vmul.f32 %v388, %v352
    %v397 = vmul.f32 %v389, %v352
    %v398 = vadd.f32 %v394, %v396
    %v399 = vadd.f32 %v395, %v397
    %v400 = vmul.f32 %v388, %v358
    %v401 = vmul.f32 %v389, %v358
    %v402 = vld [vmem:[#allocation7] sm:$0xff]
    %v403 = vld [vmem:[#allocation7 + $0x8] sm:$0xff]
    %v404 = vld [vmem:[#allocation7 + $0x10] sm:$0xff]
    %v405 = vld [vmem:[#allocation7 + $0x18] sm:$0xff]
    %v406 = vld [vmem:[#allocation7 + $0x20] sm:$0xff]
    %v407 = vld [vmem:[#allocation7 + $0x28] sm:$0xff]
    %v408 = vld [vmem:[#allocation7 + $0x30] sm:$0xff]
    %v409 = vld [vmem:[#allocation7 + $0x38] sm:$0xff]
    %v410 = vld [vmem:[#allocation7 + $0x40] sm:$0xff]
    %v411 = vld [vmem:[#allocation7 + $0x48] sm:$0xff]
    %v412 = vld [vmem:[#allocation7 + $0x50] sm:$0xff]
    %v413 = vld [vmem:[#allocation7 + $0x58] sm:$0xff]
    %v414 = vld [vmem:[#allocation7 + $0x60] sm:$0xff]
    %v415 = vld [vmem:[#allocation7 + $0x68] sm:$0xff]
    %v416 = vld [vmem:[#allocation7 + $0x70] sm:$0xff]
    %v417 = vld [vmem:[#allocation7 + $0x78] sm:$0xff]
    %v418 = vld [vmem:[#allocation7 + $0x80] sm:$0xff]
    %v419 = vld [vmem:[#allocation7 + $0x88] sm:$0xff]
    %v420 = vld [vmem:[#allocation7 + $0x90] sm:$0xff]
    %v421 = vld [vmem:[#allocation7 + $0x98] sm:$0xff]
    %v422 = vld [vmem:[#allocation7 + $0xa0] sm:$0xff]
    %v423 = vld [vmem:[#allocation7 + $0xa8] sm:$0xff]
    %v424 = vld [vmem:[#allocation7 + $0xb0] sm:$0xff]
    %v425 = vld [vmem:[#allocation7 + $0xb8] sm:$0xff]
    %v426 = vld [vmem:[#allocation7 + $0xc0] sm:$0xff]
    %v427 = vld [vmem:[#allocation7 + $0xc8] sm:$0xff]
    %v428 = vld [vmem:[#allocation7 + $0xd0] sm:$0xff]
    %v429 = vld [vmem:[#allocation7 + $0xd8] sm:$0xff]
    %v430 = vld [vmem:[#allocation7 + $0xe0] sm:$0xff]
    %v431 = vld [vmem:[#allocation7 + $0xe8] sm:$0xff]
    %v432 = vld [vmem:[#allocation7 + $0xf0] sm:$0xff]
    %v433 = vld [vmem:[#allocation7 + $0xf8] sm:$0xff]
    %v434 = vld [vmem:[#allocation7 + $0x100] sm:$0xff]
    %v435 = vld [vmem:[#allocation7 + $0x108] sm:$0xff]
    %v436 = vld [vmem:[#allocation7 + $0x110] sm:$0xff]
    %v437 = vld [vmem:[#allocation7 + $0x118] sm:$0xff]
    %v438 = vld [vmem:[#allocation7 + $0x120] sm:$0xff]
    %v439 = vld [vmem:[#allocation7 + $0x128] sm:$0xff]
    %v440 = vld [vmem:[#allocation7 + $0x130] sm:$0xff]
    %v441 = vld [vmem:[#allocation7 + $0x138] sm:$0xff]
    %v442 = vld [vmem:[#allocation7 + $0x140] sm:$0xff]
    %v443 = vld [vmem:[#allocation7 + $0x148] sm:$0xff]
    %v444 = vld [vmem:[#allocation7 + $0x150] sm:$0xff]
    %v445 = vld [vmem:[#allocation7 + $0x158] sm:$0xff]
    %v446 = vld [vmem:[#allocation7 + $0x160] sm:$0xff]
    %v447 = vld [vmem:[#allocation7 + $0x168] sm:$0xff]
    %v448 = vld [vmem:[#allocation7 + $0x170] sm:$0xff]
    %v449 = vld [vmem:[#allocation7 + $0x178] sm:$0xff]
    %v450 = vld [vmem:[#allocation7 + $0x180] sm:$0xff]
    %v451 = vld [vmem:[#allocation7 + $0x188] sm:$0xff]
    %v452 = vld [vmem:[#allocation7 + $0x190] sm:$0xff]
    %v453 = vld [vmem:[#allocation7 + $0x198] sm:$0xff]
    %v454 = vld [vmem:[#allocation7 + $0x1a0] sm:$0xff]
    %v455 = vld [vmem:[#allocation7 + $0x1a8] sm:$0xff]
    %v456 = vld [vmem:[#allocation7 + $0x1b0] sm:$0xff]
    %v457 = vld [vmem:[#allocation7 + $0x1b8] sm:$0xff]
    %v458 = vld [vmem:[#allocation7 + $0x1c0] sm:$0xff]
    %v459 = vld [vmem:[#allocation7 + $0x1c8] sm:$0xff]
    %v460 = vld [vmem:[#allocation7 + $0x1d0] sm:$0xff]
    %v461 = vld [vmem:[#allocation7 + $0x1d8] sm:$0xff]
    %v462 = vld [vmem:[#allocation7 + $0x1e0] sm:$0xff]
    %v463 = vld [vmem:[#allocation7 + $0x1e8] sm:$0xff]
    %v464 = vld [vmem:[#allocation7 + $0x1f0] sm:$0xff]
    %v465 = vld [vmem:[#allocation7 + $0x1f8] sm:$0xff]
    %v466 = vld [vmem:[#allocation8] sm:$0xff]
    %v467 = vld [vmem:[#allocation8 + $0x8] sm:$0xff]
    %v468 = vld [vmem:[#allocation8 + $0x10] sm:$0xff]
    %v469 = vld [vmem:[#allocation8 + $0x18] sm:$0xff]
    %v470 = vld [vmem:[#allocation8 + $0x20] sm:$0xff]
    %v471 = vld [vmem:[#allocation8 + $0x28] sm:$0xff]
    %v472 = vld [vmem:[#allocation8 + $0x30] sm:$0xff]
    %v473 = vld [vmem:[#allocation8 + $0x38] sm:$0xff]
    %v474 = vld [vmem:[#allocation8 + $0x40] sm:$0xff]
    %v475 = vld [vmem:[#allocation8 + $0x48] sm:$0xff]
    %v476 = vld [vmem:[#allocation8 + $0x50] sm:$0xff]
    %v477 = vld [vmem:[#allocation8 + $0x58] sm:$0xff]
    %v478 = vld [vmem:[#allocation8 + $0x60] sm:$0xff]
    %v479 = vld [vmem:[#allocation8 + $0x68] sm:$0xff]
    %v480 = vld [vmem:[#allocation8 + $0x70] sm:$0xff]
    %v481 = vld [vmem:[#allocation8 + $0x78] sm:$0xff]
    %v482 = vld [vmem:[#allocation8 + $0x80] sm:$0xff]
    %v483 = vld [vmem:[#allocation8 + $0x88] sm:$0xff]
    %v484 = vld [vmem:[#allocation8 + $0x90] sm:$0xff]
    %v485 = vld [vmem:[#allocation8 + $0x98] sm:$0xff]
    %v486 = vld [vmem:[#allocation8 + $0xa0] sm:$0xff]
    %v487 = vld [vmem:[#allocation8 + $0xa8] sm:$0xff]
    %v488 = vld [vmem:[#allocation8 + $0xb0] sm:$0xff]
    %v489 = vld [vmem:[#allocation8 + $0xb8] sm:$0xff]
    %v490 = vld [vmem:[#allocation8 + $0xc0] sm:$0xff]
    %v491 = vld [vmem:[#allocation8 + $0xc8] sm:$0xff]
    %v492 = vld [vmem:[#allocation8 + $0xd0] sm:$0xff]
    %v493 = vld [vmem:[#allocation8 + $0xd8] sm:$0xff]
    %v494 = vld [vmem:[#allocation8 + $0xe0] sm:$0xff]
    %v495 = vld [vmem:[#allocation8 + $0xe8] sm:$0xff]
    %v496 = vld [vmem:[#allocation8 + $0xf0] sm:$0xff]
    %v497 = vld [vmem:[#allocation8 + $0xf8] sm:$0xff]
    %v498 = vld [vmem:[#allocation8 + $0x100] sm:$0xff]
    %v499 = vld [vmem:[#allocation8 + $0x108] sm:$0xff]
    %v500 = vld [vmem:[#allocation8 + $0x110] sm:$0xff]
    %v501 = vld [vmem:[#allocation8 + $0x118] sm:$0xff]
    %v502 = vld [vmem:[#allocation8 + $0x120] sm:$0xff]
    %v503 = vld [vmem:[#allocation8 + $0x128] sm:$0xff]
    %v504 = vld [vmem:[#allocation8 + $0x130] sm:$0xff]
    %v505 = vld [vmem:[#allocation8 + $0x138] sm:$0xff]
    %v506 = vld [vmem:[#allocation8 + $0x140] sm:$0xff]
    %v507 = vld [vmem:[#allocation8 + $0x148] sm:$0xff]
    %v508 = vld [vmem:[#allocation8 + $0x150] sm:$0xff]
    %v509 = vld [vmem:[#allocation8 + $0x158] sm:$0xff]
    %v510 = vld [vmem:[#allocation8 + $0x160] sm:$0xff]
    %v511 = vld [vmem:[#allocation8 + $0x168] sm:$0xff]
    %v512 = vld [vmem:[#allocation8 + $0x170] sm:$0xff]
    %v513 = vld [vmem:[#allocation8 + $0x178] sm:$0xff]
    %v514 = vld [vmem:[#allocation8 + $0x180] sm:$0xff]
    %v515 = vld [vmem:[#allocation8 + $0x188] sm:$0xff]
    %v516 = vld [vmem:[#allocation8 + $0x190] sm:$0xff]
    %v517 = vld [vmem:[#allocation8 + $0x198] sm:$0xff]
    %v518 = vld [vmem:[#allocation8 + $0x1a0] sm:$0xff]
    %v519 = vld [vmem:[#allocation8 + $0x1a8] sm:$0xff]
    %v520 = vld [vmem:[#allocation8 + $0x1b0] sm:$0xff]
    %v521 = vld [vmem:[#allocation8 + $0x1b8] sm:$0xff]
    %v522 = vld [vmem:[#allocation8 + $0x1c0] sm:$0xff]
    %v523 = vld [vmem:[#allocation8 + $0x1c8] sm:$0xff]
    %v524 = vld [vmem:[#allocation8 + $0x1d0] sm:$0xff]
    %v525 = vld [vmem:[#allocation8 + $0x1d8] sm:$0xff]
    %v526 = vld [vmem:[#allocation8 + $0x1e0] sm:$0xff]
    %v527 = vld [vmem:[#allocation8 + $0x1e8] sm:$0xff]
    %v528 = vld [vmem:[#allocation8 + $0x1f0] sm:$0xff]
    %v529 = vld [vmem:[#allocation8 + $0x1f8] sm:$0xff]
    %530 = vmatprep.subr.mxu0 %v467
    %531 = vmatpush1.msra.mxu0 %v466
    %532 = vmatprep.subr.mxu0 %v469
    %533 = vmatpush1.msra.mxu0 %v468
    %534 = vmatprep.subr.mxu0 %v471
    %535 = vmatpush1.msra.mxu0 %v470
    %536 = vmatprep.subr.mxu0 %v473
    %537 = vmatpush1.msra.mxu0 %v472
    %538 = vmatprep.subr.mxu0 %v475
    %539 = vmatpush1.msra.mxu0 %v474
    %540 = vmatprep.subr.mxu0 %v477
    %541 = vmatpush1.msra.mxu0 %v476
    %542 = vmatprep.subr.mxu0 %v479
    %543 = vmatpush1.msra.mxu0 %v478
    %544 = vmatprep.subr.mxu0 %v481
    %545 = vmatpush1.msra.mxu0 %v480
    %546 = vmatprep.subr.mxu0 %v483
    %547 = vmatpush1.msra.mxu0 %v482
    %548 = vmatprep.subr.mxu0 %v485
    %549 = vmatpush1.msra.mxu0 %v484
    %550 = vmatprep.subr.mxu0 %v487
    %551 = vmatpush1.msra.mxu0 %v486
    %552 = vmatprep.subr.mxu0 %v489
    %553 = vmatpush1.msra.mxu0 %v488
    %554 = vmatprep.subr.mxu0 %v491
    %555 = vmatpush1.msra.mxu0 %v490
    %556 = vmatprep.subr.mxu0 %v493
    %557 = vmatpush1.msra.mxu0 %v492
    %558 = vmatprep.subr.mxu0 %v495
    %559 = vmatpush1.msra.mxu0 %v494
    %560 = vmatprep.subr.mxu0 %v497
    %561 = vmatpush1.msra.mxu0 %v496
    %562 = vmatprep.subr.mxu0 %v499
    %563 = vmatpush1.msra.mxu0 %v498
    %564 = vmatprep.subr.mxu0 %v501
    %565 = vmatpush1.msra.mxu0 %v500
    %566 = vmatprep.subr.mxu0 %v503
    %567 = vmatpush1.msra.mxu0 %v502
    %568 = vmatprep.subr.mxu0 %v505
    %569 = vmatpush1.msra.mxu0 %v504
    %570 = vmatprep.subr.mxu0 %v507
    %571 = vmatpush1.msra.mxu0 %v506
    %572 = vmatprep.subr.mxu0 %v509
    %573 = vmatpush1.msra.mxu0 %v508
    %574 = vmatprep.subr.mxu0 %v511
    %575 = vmatpush1.msra.mxu0 %v510
    %576 = vmatprep.subr.mxu0 %v513
    %577 = vmatpush1.msra.mxu0 %v512
    %578 = vmatprep.subr.mxu0 %v515
    %579 = vmatpush1.msra.mxu0 %v514
    %580 = vmatprep.subr.mxu0 %v517
    %581 = vmatpush1.msra.mxu0 %v516
    %582 = vmatprep.subr.mxu0 %v519
    %583 = vmatpush1.msra.mxu0 %v518
    %584 = vmatprep.subr.mxu0 %v521
    %585 = vmatpush1.msra.mxu0 %v520
    %586 = vmatprep.subr.mxu0 %v523
    %587 = vmatpush1.msra.mxu0 %v522
    %588 = vmatprep.subr.mxu0 %v525
    %589 = vmatpush1.msra.mxu0 %v524
    %590 = vmatprep.subr.mxu0 %v527
    %591 = vmatpush1.msra.mxu0 %v526
    %592 = vmatprep.subr.mxu0 %v529
    %593 = vmatpush1.msra.mxu0 %v528
    %594 = vmatprep.mubr.f32.mxu0 %v401
    %595 = vmatmul.mubr.f32.gmra.mrb[0].mxu0 %v400
    %v596 = vpop.f32.mrb[0].mxu0
    %v597 = vadd.f32 0.0, %v596
    %v598 = vpop.f32.mrb[0].mxu0
    %v599 = vadd.f32 0.0, %v598
    %600 = vdwg.mxu0
    %601 = vmatprep.subr.mxu0 %v403
    %602 = vmatpush1.msra.mxu0 %v402
    %603 = vmatprep.subr.mxu0 %v405
    %604 = vmatpush1.msra.mxu0 %v404
    %605 = vmatprep.subr.mxu0 %v407
    %606 = vmatpush1.msra.mxu0 %v406
    %607 = vmatprep.subr.mxu0 %v409
    %608 = vmatpush1.msra.mxu0 %v408
    %609 = vmatprep.subr.mxu0 %v411
    %610 = vmatpush1.msra.mxu0 %v410
    %611 = vmatprep.subr.mxu0 %v413
    %612 = vmatpush1.msra.mxu0 %v412
    %613 = vmatprep.subr.mxu0 %v415
    %614 = vmatpush1.msra.mxu0 %v414
    %615 = vmatprep.subr.mxu0 %v417
    %616 = vmatpush1.msra.mxu0 %v416
    %617 = vmatprep.subr.mxu0 %v419
    %618 = vmatpush1.msra.mxu0 %v418
    %619 = vmatprep.subr.mxu0 %v421
    %620 = vmatpush1.msra.mxu0 %v420
    %621 = vmatprep.subr.mxu0 %v423
    %622 = vmatpush1.msra.mxu0 %v422
    %623 = vmatprep.subr.mxu0 %v425
    %624 = vmatpush1.msra.mxu0 %v424
    %625 = vmatprep.subr.mxu0 %v427
    %626 = vmatpush1.msra.mxu0 %v426
    %627 = vmatprep.subr.mxu0 %v429
    %628 = vmatpush1.msra.mxu0 %v428
    %629 = vmatprep.subr.mxu0 %v431
    %630 = vmatpush1.msra.mxu0 %v430
    %631 = vmatprep.subr.mxu0 %v433
    %632 = vmatpush1.msra.mxu0 %v432
    %633 = vmatprep.subr.mxu0 %v435
    %634 = vmatpush1.msra.mxu0 %v434
    %635 = vmatprep.subr.mxu0 %v437
    %636 = vmatpush1.msra.mxu0 %v436
    %637 = vmatprep.subr.mxu0 %v439
    %638 = vmatpush1.msra.mxu0 %v438
    %639 = vmatprep.subr.mxu0 %v441
    %640 = vmatpush1.msra.mxu0 %v440
    %641 = vmatprep.subr.mxu0 %v443
    %642 = vmatpush1.msra.mxu0 %v442
    %643 = vmatprep.subr.mxu0 %v445
    %644 = vmatpush1.msra.mxu0 %v444
    %645 = vmatprep.subr.mxu0 %v447
    %646 = vmatpush1.msra.mxu0 %v446
    %647 = vmatprep.subr.mxu0 %v449
    %648 = vmatpush1.msra.mxu0 %v448
    %649 = vmatprep.subr.mxu0 %v451
    %650 = vmatpush1.msra.mxu0 %v450
    %651 = vmatprep.subr.mxu0 %v453
    %652 = vmatpush1.msra.mxu0 %v452
    %653 = vmatprep.subr.mxu0 %v455
    %654 = vmatpush1.msra.mxu0 %v454
    %655 = vmatprep.subr.mxu0 %v457
    %656 = vmatpush1.msra.mxu0 %v456
    %657 = vmatprep.subr.mxu0 %v459
    %658 = vmatpush1.msra.mxu0 %v458
    %659 = vmatprep.subr.mxu0 %v461
    %660 = vmatpush1.msra.mxu0 %v460
    %661 = vmatprep.subr.mxu0 %v463
    %662 = vmatpush1.msra.mxu0 %v462
    %663 = vmatprep.subr.mxu0 %v465
    %664 = vmatpush1.msra.mxu0 %v464
    %665 = vmatprep.mubr.f32.mxu0 %v399
    %666 = vmatmul.mubr.f32.gmra.mrb[0].mxu0 %v398
    %v667 = vpop.f32.mrb[0].mxu0
    %v668 = vadd.f32 %v597, %v667
    %v669 = vpop.f32.mrb[0].mxu0
    %v670 = vadd.f32 %v599, %v669
    %671 = vdwg.mxu0
    %672 = vst [vmem:[#allocation10] sm:$0xff] %v668
    %673 = vst [vmem:[#allocation10 + $0x8] sm:$0xff] %v670
    // Predicated region
    $region38: #{tpu_custom_call.1} parent=1 // pred_check
      _
    $region39: #{tpu_custom_call.1} parent=1 // pred_check_branch
      %675 = sbr.rel (0) target = $region41
    $region40: #{tpu_custom_call.1} parent=1 // pred_region
      %s677 = ssub.s32 256, 256
      %678 = vsyncadd [#allocation4], %s677
      %s680 = sshll.u32 [#allocation10], 4
      %s681 = int_to_ptr.vmem [resolvable:$true] %s680
      %683 = dma.vmem_to_hbm [thread:$0]  %s681, 256, %s5, [#allocation4]
    $region41: #{tpu_custom_call.1} parent=1 // pred_fallthru
      _
    // Predicated region
    $region42: #{tpu_custom_call.1} parent=1 // pred_check
      _
    $region43: #{tpu_custom_call.1} parent=1 // pred_check_branch
      %685 = sbr.rel (0) target = $region45
    $region44: #{tpu_custom_call.1} parent=1 // pred_region
      %686 = dma.done [#allocation4], 256
    $region45: #{tpu_custom_call.1} parent=1 // pred_fallthru
      _
    %687 = vsyncpa [#allocation3], 1
    %688 = vsyncpa [#allocation6], 1
    %689 = vsyncpa [#allocation9], 1
    %690 = vsyncpa [#allocation4], 1

</llo_original>
